<compile_context>
chip_gen: v5e
topology: v5e:2x2
jax: 0.10.0
libtpu: 0.0.40
codegen_flags: <defaults>
</compile_context>

<pallas_src>
import jax
import jax.numpy as jnp
from jax.experimental import pallas as pl
from jax.experimental.pallas import tpu as pltpu


def _round_up(x, m):
    return ((x + m - 1) // m) * m


def mlp_kernel(x_ref, w1_ref, b1_ref, w2_ref, b2_ref, o_ref):
    # In-kernel bf16 cast of the f32 input tile (VPU work, hidden under the MXU).
    x = x_ref[...].astype(jnp.bfloat16)
    # First linear: bf16 x bf16 on the MXU, f32 accumulate.
    h = jnp.dot(x, w1_ref[...], preferred_element_type=jnp.float32)
    # Bias + ReLU in f32 on the VPU (lane-dense: hid padded to 384).
    h = jnp.maximum(h + b1_ref[...], 0.0)
    # Second linear: explicit bf16 cast of the operand, f32 accumulate.
    y = jnp.dot(h.astype(jnp.bfloat16), w2_ref[...],
                preferred_element_type=jnp.float32)
    o_ref[...] = (y + b2_ref[...]).astype(o_ref.dtype)


def prepare_params(w1, b1, w2, b2):
    """One-time weight preparation (do NOT call per forward pass).

    w1: (784, 300), b1: (300,), w2: (300, 10), b2: (10,)  (weights pre-transposed
    to (in_features, out_features)).  Returns bf16 weights / f32 biases with the
    hidden dim padded 300 -> 384 and the output dim padded 10 -> 128."""
    in_f, hid = w1.shape
    hid2, out_f = w2.shape
    assert hid == hid2 and b1.shape == (hid,) and b2.shape == (out_f,)

    hid_p = _round_up(hid, 128)    # 300 -> 384
    out_p = _round_up(out_f, 128)  # 10  -> 128

    w1_p = jnp.zeros((in_f, hid_p), jnp.bfloat16).at[:, :hid].set(w1.astype(jnp.bfloat16))
    b1_p = jnp.zeros((1, hid_p), jnp.float32).at[:, :hid].set(b1.astype(jnp.float32)[None, :])
    w2_p = jnp.zeros((hid_p, out_p), jnp.bfloat16).at[:hid, :out_f].set(w2.astype(jnp.bfloat16))
    b2_p = jnp.zeros((1, out_p), jnp.float32).at[:, :out_f].set(b2.astype(jnp.float32)[None, :])

    return {
        "w1": w1_p, "b1": b1_p, "w2": w2_p, "b2": b2_p,
        "in_f": in_f, "hid_p": hid_p, "out_f": out_f, "out_p": out_p,
    }


def _choose_tb(batch, tb):
    # Sublane-aligned batch tile, at most `tb`.
    TB = min(tb, _round_up(batch, 8))
    if batch > 8:
        # v7x megacore: guarantee >= 2 grid steps so the "parallel" axis shards
        # across both TensorCores.
        TB = min(TB, _round_up(pl.cdiv(batch, 2), 8))
    return max(TB, 8)


def mlp_forward(x_nchw, params, *, tb=512, out_dtype=jnp.float32):
    """x_nchw: (B, C, H, W) float32 with C*H*W == 784.  params: prepare_params()."""
    B = x_nchw.shape[0]
    x_flat = x_nchw.reshape(B, -1)             # == torch .view(B, -1); f32, no copy pass
    in_f, hid_p = params["in_f"], params["hid_p"]
    out_f, out_p = params["out_f"], params["out_p"]
    assert x_flat.shape[1] == in_f

    TB = _choose_tb(B, tb)
    grid = (pl.cdiv(B, TB),)                   # ragged last tile handled by Pallas masking

    cost = pl.CostEstimate(
        flops=2 * B * in_f * hid_p + 2 * B * hid_p * out_p,
        transcendentals=0,
        bytes_accessed=(B * in_f * 4            # x (f32, read once by the kernel)
                        + in_f * hid_p * 2      # W1 (bf16, padded)
                        + hid_p * 4             # b1 (f32)
                        + hid_p * out_p * 2     # W2 (bf16, padded)
                        + out_p * 4             # b2 (f32)
                        + B * out_p * jnp.dtype(out_dtype).itemsize),  # out (padded)
    )

    out = pl.pallas_call(
        mlp_kernel,
        out_shape=jax.ShapeDtypeStruct((B, out_p), out_dtype),
        grid_spec=pltpu.PrefetchScalarGridSpec(
            num_scalar_prefetch=0,
            grid=grid,
            in_specs=[
                pl.BlockSpec((TB, in_f), lambda i: (i, 0)),      # x tile, pipelined
                pl.BlockSpec((in_f, hid_p), lambda i: (0, 0)),   # W1 resident
                pl.BlockSpec((1, hid_p), lambda i: (0, 0)),      # b1 resident
                pl.BlockSpec((hid_p, out_p), lambda i: (0, 0)),  # W2 resident
                pl.BlockSpec((1, out_p), lambda i: (0, 0)),      # b2 resident
            ],
            out_specs=pl.BlockSpec((TB, out_p), lambda i: (i, 0)),
        ),
        compiler_params=pltpu.CompilerParams(
            dimension_semantics=("parallel",)),
        cost_estimate=cost,
    )(x_flat, params["w1"], params["b1"], params["w2"], params["b2"])

    return out[:, :out_f]


def init_params(key):
    """Deterministic init mimicking PyTorch nn.Linear default (uniform +/- 1/sqrt(fan_in)).
    Weights are stored already transposed: (in_features, out_features)."""
    k1, k2, k3, k4 = jax.random.split(key, 4)
    bound1 = 1.0 / jnp.sqrt(784.0)
    bound2 = 1.0 / jnp.sqrt(300.0)
    w1 = jax.random.uniform(k1, (784, 300), jnp.float32, -bound1, bound1)
    b1 = jax.random.uniform(k2, (300,), jnp.float32, -bound1, bound1)
    w2 = jax.random.uniform(k3, (300, 10), jnp.float32, -bound2, bound2)
    b2 = jax.random.uniform(k4, (10,), jnp.float32, -bound2, bound2)
    return w1, b1, w2, b2


if __name__ == "__main__":
    key = jax.random.PRNGKey(0)
    kx, kp = jax.random.split(key)

    # MNIST-like batch: (batch=8, channels=1, 28, 28) -> flatten gives 784 features.
    x = jax.random.normal(kx, (8, 1, 28, 28), dtype=jnp.float32)
    w1, b1, w2, b2 = init_params(kp)
    params = prepare_params(w1, b1, w2, b2)     # one-time weight prep (bf16 + padding)

    y = jax.block_until_ready(mlp_forward(x, params))
    assert y.shape == (8, 10)

    # Cross-check against plain f32 JAX reference (loose tol: kernel uses bf16 operands).
    ref = jnp.maximum(x.reshape(8, -1) @ w1 + b1, 0.0) @ w2 + b2
    assert jnp.allclose(y, ref, atol=5e-2, rtol=5e-2), "mismatch vs reference (B=8)"

    # Also exercise the multi-step grid + ragged last batch tile path.
    x2 = jax.random.normal(jax.random.PRNGKey(1), (20, 1, 28, 28), dtype=jnp.float32)
    y2 = jax.block_until_ready(mlp_forward(x2, params))
    ref2 = jnp.maximum(x2.reshape(20, -1) @ w1 + b1, 0.0) @ w2 + b2
    assert y2.shape == (20, 10)
    assert jnp.allclose(y2, ref2, atol=5e-2, rtol=5e-2), "mismatch vs reference (B=20)"

    print("KERNEL_OK")
</pallas_src>

<mosaic_0001>
module attributes {stable_mosaic.version = 11 : i64} {
  func.func @mlp_kernel(%arg0: i32, %arg1: memref<8x784xf32, #tpu.memory_space<vmem>>, %arg2: memref<784x384xbf16, #tpu.memory_space<vmem>>, %arg3: memref<1x384xf32, #tpu.memory_space<vmem>>, %arg4: memref<384x128xbf16, #tpu.memory_space<vmem>>, %arg5: memref<1x128xf32, #tpu.memory_space<vmem>>, %arg6: memref<8x128xf32, #tpu.memory_space<vmem>>) attributes {dimension_semantics = [#tpu.dimension_semantics<parallel>], iteration_bounds = array<i64: 1>, scalar_prefetch = 0 : i64, scratch_operands = 0 : i64, tpu.core_type = #tpu.core_type<tc>, window_params = [{transform_indices = @transform_0, window_bounds = array<i64: 8, 784>}, {pipeline_mode = #tpu.pipeline_mode<synchronous>, transform_indices = @transform_1, window_bounds = array<i64: 784, 384>}, {pipeline_mode = #tpu.pipeline_mode<synchronous>, transform_indices = @transform_2, window_bounds = array<i64: 1, 384>}, {pipeline_mode = #tpu.pipeline_mode<synchronous>, transform_indices = @transform_3, window_bounds = array<i64: 384, 128>}, {pipeline_mode = #tpu.pipeline_mode<synchronous>, transform_indices = @transform_4, window_bounds = array<i64: 1, 128>}, {transform_indices = @transform_5, window_bounds = array<i64: 8, 128>}]} {
    %c0 = arith.constant 0 : index
    %c0_0 = arith.constant 0 : index
    %0 = vector.load %arg1[%c0, %c0_0] : memref<8x784xf32, #tpu.memory_space<vmem>>, vector<8x784xf32>
    %1 = arith.truncf %0 : vector<8x784xf32> to vector<8x784xbf16>
    %c0_1 = arith.constant 0 : index
    %c0_2 = arith.constant 0 : index
    %2 = vector.load %arg2[%c0_1, %c0_2] : memref<784x384xbf16, #tpu.memory_space<vmem>>, vector<784x384xbf16>
    %cst = arith.constant dense<0.000000e+00> : vector<8x384xf32>
    %3 = tpu.matmul %1, %2, %cst {dimension_numbers = #tpu.dot_dimension_numbers<[1], [0], [0], [1], [0, 0, 1, 1], [], []>} : vector<8x784xbf16>, vector<784x384xbf16>, vector<8x384xf32> -> vector<8x384xf32>
    %c0_3 = arith.constant 0 : index
    %c0_4 = arith.constant 0 : index
    %4 = vector.load %arg3[%c0_3, %c0_4] : memref<1x384xf32, #tpu.memory_space<vmem>>, vector<1x384xf32>
    %5 = vector.broadcast %4 : vector<1x384xf32> to vector<8x384xf32>
    %6 = arith.addf %3, %5 : vector<8x384xf32>
    %cst_5 = arith.constant 0.000000e+00 : f32
    %7 = vector.broadcast %cst_5 : f32 to vector<8x384xf32>
    %8 = arith.maximumf %6, %7 : vector<8x384xf32>
    %9 = arith.truncf %8 : vector<8x384xf32> to vector<8x384xbf16>
    %c0_6 = arith.constant 0 : index
    %c0_7 = arith.constant 0 : index
    %10 = vector.load %arg4[%c0_6, %c0_7] : memref<384x128xbf16, #tpu.memory_space<vmem>>, vector<384x128xbf16>
    %cst_8 = arith.constant dense<0.000000e+00> : vector<8x128xf32>
    %11 = tpu.matmul %9, %10, %cst_8 {dimension_numbers = #tpu.dot_dimension_numbers<[1], [0], [0], [1], [0, 0, 1, 1], [], []>} : vector<8x384xbf16>, vector<384x128xbf16>, vector<8x128xf32> -> vector<8x128xf32>
    %c0_9 = arith.constant 0 : index
    %c0_10 = arith.constant 0 : index
    %12 = vector.load %arg5[%c0_9, %c0_10] : memref<1x128xf32, #tpu.memory_space<vmem>>, vector<1x128xf32>
    %13 = vector.broadcast %12 : vector<1x128xf32> to vector<8x128xf32>
    %14 = arith.addf %11, %13 : vector<8x128xf32>
    %c0_11 = arith.constant 0 : index
    %c0_12 = arith.constant 0 : index
    %15 = vector.load %arg6[%c0_11, %c0_12] : memref<8x128xf32, #tpu.memory_space<vmem>>, vector<8x128xf32>
    tpu.vector_store %arg6[%c0_11, %c0_12], %14 {strides = array<i32>} : memref<8x128xf32, #tpu.memory_space<vmem>>, vector<8x128xf32>,
    return
  }
  func.func @transform_0(%arg0: i32) -> (i32, i32) {
    %c0_i32 = arith.constant 0 : i32
    %c0_i32_0 = arith.constant 0 : i32
    return %arg0, %c0_i32 : i32, i32
  }
  func.func @transform_1(%arg0: i32) -> (i32, i32) {
    %c0_i32 = arith.constant 0 : i32
    %c0_i32_0 = arith.constant 0 : i32
    %c0_i32_1 = arith.constant 0 : i32
    return %c0_i32, %c0_i32_0 : i32, i32
  }
  func.func @transform_2(%arg0: i32) -> (i32, i32) {
    %c0_i32 = arith.constant 0 : i32
    %c0_i32_0 = arith.constant 0 : i32
    %c0_i32_1 = arith.constant 0 : i32
    return %c0_i32, %c0_i32_0 : i32, i32
  }
  func.func @transform_3(%arg0: i32) -> (i32, i32) {
    %c0_i32 = arith.constant 0 : i32
    %c0_i32_0 = arith.constant 0 : i32
    %c0_i32_1 = arith.constant 0 : i32
    return %c0_i32, %c0_i32_0 : i32, i32
  }
  func.func @transform_4(%arg0: i32) -> (i32, i32) {
    %c0_i32 = arith.constant 0 : i32
    %c0_i32_0 = arith.constant 0 : i32
    %c0_i32_1 = arith.constant 0 : i32
    return %c0_i32, %c0_i32_0 : i32, i32
  }
  func.func @transform_5(%arg0: i32) -> (i32, i32) {
    %c0_i32 = arith.constant 0 : i32
    %c0_i32_0 = arith.constant 0 : i32
    return %arg0, %c0_i32 : i32, i32
  }
}

</mosaic_0001>

<llo_original>
// kernel: tpu_custom_call.1
$region0: #{tpu_custom_call.1}
  #allocation0 [shape = 'u32[]', space=smem, size = 0x4, offset = 0x4, fixed_abs, tag = 'smem constant byte address 0x4 - core index']
  #allocation1 [shape = 'u32[72,128]{1,0:T(1,128)}', space=vmem, size = 0x9000, scoped, tag = 'internal scratch']
  %s0 = inlined_call_operand.hbm [shape: f32[8,784], index: 0, kind: input, shape index: {}]
  %s1 = inlined_call_operand.hbm [shape: bf16[784,384], index: 1, kind: input, shape index: {}]
  %s2 = inlined_call_operand.hbm [shape: f32[1,384], index: 2, kind: input, shape index: {}]
  %s3 = inlined_call_operand.hbm [shape: bf16[384,128], index: 3, kind: input, shape index: {}]
  %s4 = inlined_call_operand.vmem [shape: f32[1,128], index: 4, kind: input, shape index: {}]
  %s5 = inlined_call_operand.hbm [shape: f32[8,128], index: 5, kind: output, shape index: {}]
  %s6 = sld [smem:[#allocation0]]
  $region46: #{tpu_custom_call.1} parent=0
    _
  %s8 = ssub.s32 1, %s6
  %s9 = scalar_select 0, %s8, %s6
  $region1: #{tpu_custom_call.1} parent=0
    #allocation2 [shape = 'u8[28672]{0}', space=vmem, size = 0x7000, scoped, tag = 'input window, operand 0, single buffered']
    #allocation3 [shape = 's32[1]{0}', space=sflag, size = 0x4, scoped, tag = 'scoped memory for tpu_custom_call.1']
    #allocation4 [shape = 's32[1]{0}', space=sflag, size = 0x4, scoped, tag = 'scoped memory for tpu_custom_call.1']
    #allocation5 [shape = 'u8[602112]{0}', space=vmem, size = 0x93000, scoped, tag = 'input window, operand 1, single buffered']
    #allocation6 [shape = 's32[1]{0}', space=sflag, size = 0x4, scoped, tag = 'scoped memory for tpu_custom_call.1']
    #allocation7 [shape = 'u8[1536]{0}', space=vmem, size = 0x800, scoped, tag = 'input window, operand 2, single buffered']
    #allocation8 [shape = 'u8[98304]{0}', space=vmem, size = 0x18000, scoped, tag = 'input window, operand 3, single buffered']
    #allocation9 [shape = 's32[1]{0}', space=sflag, size = 0x4, scoped, tag = 'scoped memory for tpu_custom_call.1']
    #allocation10 [shape = 'u8[4096]{0}', space=vmem, size = 0x1000, scoped, tag = 'output window, operand 0, single buffered']
    %10 = vsyncpa [#allocation3], 0
    %11 = vsyncpa [#allocation6], 0
    %12 = vsyncpa [#allocation9], 0
    %13 = vsyncpa [#allocation4], 0
    // Predicated region
    $region2: #{tpu_custom_call.1} parent=1 // pred_check
      _
    $region3: #{tpu_custom_call.1} parent=1 // pred_check_branch
      %15 = sbr.rel (0) target = $region5
    $region4: #{tpu_custom_call.1} parent=1 // pred_region
      %17 = vsyncadd [#allocation3], 0
      %s19 = sshll.u32 %s0, 4
      %s20 = int_to_ptr.hbm [resolvable:$true] %s19
      %s21 = sshll.u32 [#allocation2], 4
      %s22 = int_to_ptr.vmem [resolvable:$true] %s21
      %24 = dma.hbm_to_vmem [thread:$0]  %s20, 896, %s22, [#allocation3]
    $region5: #{tpu_custom_call.1} parent=1 // pred_fallthru
      _
    // Predicated region
    $region6: #{tpu_custom_call.1} parent=1 // pred_check
      _
    $region7: #{tpu_custom_call.1} parent=1 // pred_check_branch
      %26 = sbr.rel (0) target = $region9
    $region8: #{tpu_custom_call.1} parent=1 // pred_region
      %28 = vsyncadd [#allocation6], 0
      %s29 = sshll.u32 %s1, 4
      %s30 = int_to_ptr.hbm [resolvable:$true] %s29
      %s31 = sshll.u32 [#allocation5], 4
      %s32 = int_to_ptr.vmem [resolvable:$true] %s31
      %37 = dma.hbm_to_vmem [thread:$0]  %s30, 18816, %s32, [#allocation6], 192, 192, 12
    $region9: #{tpu_custom_call.1} parent=1 // pred_fallthru
      _
    // Predicated region
    $region10: #{tpu_custom_call.1} parent=1 // pred_check
      _
    $region11: #{tpu_custom_call.1} parent=1 // pred_check_branch
      %39 = sbr.rel (0) target = $region13
    $region12: #{tpu_custom_call.1} parent=1 // pred_region
      %41 = vsyncadd [#allocation6], 0
      %s43 = sshll.u32 %s2, 4
      %s44 = int_to_ptr.hbm [resolvable:$true] %s43
      %s45 = sshll.u32 [#allocation7], 4
      %s46 = int_to_ptr.vmem [resolvable:$true] %s45
      %48 = dma.hbm_to_vmem [thread:$0]  %s44, 48, %s46, [#allocation6]
    $region13: #{tpu_custom_call.1} parent=1 // pred_fallthru
      _
    // Predicated region
    $region14: #{tpu_custom_call.1} parent=1 // pred_check
      _
    $region15: #{tpu_custom_call.1} parent=1 // pred_check_branch
      %50 = sbr.rel (0) target = $region17
    $region16: #{tpu_custom_call.1} parent=1 // pred_region
      %52 = vsyncadd [#allocation9], 0
      %s53 = sshll.u32 %s3, 4
      %s54 = int_to_ptr.hbm [resolvable:$true] %s53
      %s55 = sshll.u32 [#allocation8], 4
      %s56 = int_to_ptr.vmem [resolvable:$true] %s55
      %61 = dma.hbm_to_vmem [thread:$0]  %s54, 3072, %s56, [#allocation9], 64, 64, 4
    $region17: #{tpu_custom_call.1} parent=1 // pred_fallthru
      _
    // Predicated region
    $region18: #{tpu_custom_call.1} parent=1 // pred_check
      _
    $region19: #{tpu_custom_call.1} parent=1 // pred_check_branch
      %63 = sbr.rel (0) target = $region21
    $region20: #{tpu_custom_call.1} parent=1 // pred_region
      _
    $region21: #{tpu_custom_call.1} parent=1 // pred_fallthru
      _
    // Predicated region
    $region22: #{tpu_custom_call.1} parent=1 // pred_check
      _
    $region23: #{tpu_custom_call.1} parent=1 // pred_check_branch
      %65 = sbr.rel (0) target = $region25
    $region24: #{tpu_custom_call.1} parent=1 // pred_region
      %67 = dma.done [#allocation3], 896
    $region25: #{tpu_custom_call.1} parent=1 // pred_fallthru
      _
    // Predicated region
    $region26: #{tpu_custom_call.1} parent=1 // pred_check
      _
    $region27: #{tpu_custom_call.1} parent=1 // pred_check_branch
      %69 = sbr.rel (0) target = $region29
    $region28: #{tpu_custom_call.1} parent=1 // pred_region
      %71 = dma.done [#allocation6], 18816
    $region29: #{tpu_custom_call.1} parent=1 // pred_fallthru
      _
    // Predicated region
    $region30: #{tpu_custom_call.1} parent=1 // pred_check
      _
    $region31: #{tpu_custom_call.1} parent=1 // pred_check_branch
      %73 = sbr.rel (0) target = $region33
    $region32: #{tpu_custom_call.1} parent=1 // pred_region
      %75 = dma.done [#allocation6], 48
    $region33: #{tpu_custom_call.1} parent=1 // pred_fallthru
      _
    // Predicated region
    $region34: #{tpu_custom_call.1} parent=1 // pred_check
      _
    $region35: #{tpu_custom_call.1} parent=1 // pred_check_branch
      %77 = sbr.rel (0) target = $region37
    $region36: #{tpu_custom_call.1} parent=1 // pred_region
      %79 = dma.done [#allocation9], 3072
    $region37: #{tpu_custom_call.1} parent=1 // pred_fallthru
      _
    %v81 = vld [vmem:[#allocation2] sm:$0xff]
    %v82 = vld [vmem:[#allocation2 + $0x8] sm:$0xff]
    %v83 = vld [vmem:[#allocation2 + $0x10] sm:$0xff]
    %v84 = vld [vmem:[#allocation2 + $0x18] sm:$0xff]
    %v85 = vld [vmem:[#allocation2 + $0x20] sm:$0xff]
    %v86 = vld [vmem:[#allocation2 + $0x28] sm:$0xff]
    %v87 = vld [vmem:[#allocation2 + $0x30] sm:$0xff]
    %v88 = vpack.c.bf16 %v81, %v81
    %v89 = vpack.c.bf16 %v82, %v82
    %v90 = vpack.c.bf16 %v83, %v83
    %v91 = vpack.c.bf16 %v84, %v84
    %v92 = vpack.c.bf16 %v85, %v85
    %v93 = vpack.c.bf16 %v86, %v86
    %v94 = vpack.c.bf16 %v87, %v87
    %v95 = vld [vmem:[#allocation5] sm:$0xff]
    %v96 = vld [vmem:[#allocation5 + $0x8] sm:$0xf]
    %v97 = vld [vmem:[#allocation5 + $0xc] sm:$0xff]
    %v98 = vld [vmem:[#allocation5 + $0x14] sm:$0xf]
    %v99 = vld [vmem:[#allocation5 + $0x18] sm:$0xff]
    %v100 = vld [vmem:[#allocation5 + $0x20] sm:$0xf]
    %v101 = vld [vmem:[#allocation5 + $0x24] sm:$0xff]
    %v102 = vld [vmem:[#allocation5 + $0x2c] sm:$0xf]
    %v103 = vld [vmem:[#allocation5 + $0x30] sm:$0xff]
    %v104 = vld [vmem:[#allocation5 + $0x38] sm:$0xf]
    %v105 = vld [vmem:[#allocation5 + $0x3c] sm:$0xff]
    %v106 = vld [vmem:[#allocation5 + $0x44] sm:$0xf]
    %v107 = vld [vmem:[#allocation5 + $0x48] sm:$0xff]
    %v108 = vld [vmem:[#allocation5 + $0x50] sm:$0xf]
    %v109 = vld [vmem:[#allocation5 + $0x54] sm:$0xff]
    %v110 = vld [vmem:[#allocation5 + $0x5c] sm:$0xf]
    %v111 = vld [vmem:[#allocation5 + $0x60] sm:$0xff]
    %v112 = vld [vmem:[#allocation5 + $0x68] sm:$0xf]
    %v113 = vld [vmem:[#allocation5 + $0x6c] sm:$0xff]
    %v114 = vld [vmem:[#allocation5 + $0x74] sm:$0xf]
    %v115 = vld [vmem:[#allocation5 + $0x78] sm:$0xff]
    %v116 = vld [vmem:[#allocation5 + $0x80] sm:$0xf]
    %v117 = vld [vmem:[#allocation5 + $0x84] sm:$0xff]
    %v118 = vld [vmem:[#allocation5 + $0x8c] sm:$0xf]
    %v119 = vld [vmem:[#allocation5 + $0x90] sm:$0xff]
    %v120 = vld [vmem:[#allocation5 + $0x98] sm:$0xf]
    %v121 = vld [vmem:[#allocation5 + $0x9c] sm:$0xff]
    %v122 = vld [vmem:[#allocation5 + $0xa4] sm:$0xf]
    %v123 = vld [vmem:[#allocation5 + $0xa8] sm:$0xff]
    %v124 = vld [vmem:[#allocation5 + $0xb0] sm:$0xf]
    %v125 = vld [vmem:[#allocation5 + $0xb4] sm:$0xff]
    %v126 = vld [vmem:[#allocation5 + $0xbc] sm:$0xf]
    %v127 = vld [vmem:[#allocation5 + $0xc0] sm:$0xff]
    %v128 = vld [vmem:[#allocation5 + $0xc8] sm:$0xf]
    %v129 = vld [vmem:[#allocation5 + $0xcc] sm:$0xff]
    %v130 = vld [vmem:[#allocation5 + $0xd4] sm:$0xf]
    %v131 = vld [vmem:[#allocation5 + $0xd8] sm:$0xff]
    %v132 = vld [vmem:[#allocation5 + $0xe0] sm:$0xf]
    %v133 = vld [vmem:[#allocation5 + $0xe4] sm:$0xff]
    %v134 = vld [vmem:[#allocation5 + $0xec] sm:$0xf]
    %v135 = vld [vmem:[#allocation5 + $0xf0] sm:$0xff]
    %v136 = vld [vmem:[#allocation5 + $0xf8] sm:$0xf]
    %v137 = vld [vmem:[#allocation5 + $0xfc] sm:$0xff]
    %v138 = vld [vmem:[#allocation5 + $0x104] sm:$0xf]
    %v139 = vld [vmem:[#allocation5 + $0x108] sm:$0xff]
    %v140 = vld [vmem:[#allocation5 + $0x110] sm:$0xf]
    %v141 = vld [vmem:[#allocation5 + $0x114] sm:$0xff]
    %v142 = vld [vmem:[#allocation5 + $0x11c] sm:$0xf]
    %v143 = vld [vmem:[#allocation5 + $0x120] sm:$0xff]
    %v144 = vld [vmem:[#allocation5 + $0x128] sm:$0xf]
    %v145 = vld [vmem:[#allocation5 + $0x12c] sm:$0xff]
    %v146 = vld [vmem:[#allocation5 + $0x134] sm:$0xf]
    %v147 = vld [vmem:[#allocation5 + $0x138] sm:$0xff]
    %v148 = vld [vmem:[#allocation5 + $0x140] sm:$0xf]
    %v149 = vld [vmem:[#allocation5 + $0x144] sm:$0xff]
    %v150 = vld [vmem:[#allocation5 + $0x14c] sm:$0xf]
    %v151 = vld [vmem:[#allocation5 + $0x150] sm:$0xff]
    %v152 = vld [vmem:[#allocation5 + $0x158] sm:$0xf]
    %v153 = vld [vmem:[#allocation5 + $0x15c] sm:$0xff]
    %v154 = vld [vmem:[#allocation5 + $0x164] sm:$0xf]
    %v155 = vld [vmem:[#allocation5 + $0x168] sm:$0xff]
    %v156 = vld [vmem:[#allocation5 + $0x170] sm:$0xf]
    %v157 = vld [vmem:[#allocation5 + $0x174] sm:$0xff]
    %v158 = vld [vmem:[#allocation5 + $0x17c] sm:$0xf]
    %v159 = vld [vmem:[#allocation5 + $0x180] sm:$0xff]
    %v160 = vld [vmem:[#allocation5 + $0x188] sm:$0xf]
    %v161 = vld [vmem:[#allocation5 + $0x18c] sm:$0xff]
    %v162 = vld [vmem:[#allocation5 + $0x194] sm:$0xf]
    %v163 = vld [vmem:[#allocation5 + $0x198] sm:$0xff]
    %v164 = vld [vmem:[#allocation5 + $0x1a0] sm:$0xf]
    %v165 = vld [vmem:[#allocation5 + $0x1a4] sm:$0xff]
    %v166 = vld [vmem:[#allocation5 + $0x1ac] sm:$0xf]
    %v167 = vld [vmem:[#allocation5 + $0x1b0] sm:$0xff]
    %v168 = vld [vmem:[#allocation5 + $0x1b8] sm:$0xf]
    %v169 = vld [vmem:[#allocation5 + $0x1bc] sm:$0xff]
    %v170 = vld [vmem:[#allocation5 + $0x1c4] sm:$0xf]
    %v171 = vld [vmem:[#allocation5 + $0x1c8] sm:$0xff]
    %v172 = vld [vmem:[#allocation5 + $0x1d0] sm:$0xf]
    %v173 = vld [vmem:[#allocation5 + $0x1d4] sm:$0xff]
    %v174 = vld [vmem:[#allocation5 + $0x1dc] sm:$0xf]
    %v175 = vld [vmem:[#allocation5 + $0x1e0] sm:$0xff]
    %v176 = vld [vmem:[#allocation5 + $0x1e8] sm:$0xf]
    %v177 = vld [vmem:[#allocation5 + $0x1ec] sm:$0xff]
    %v178 = vld [vmem:[#allocation5 + $0x1f4] sm:$0xf]
    %v179 = vld [vmem:[#allocation5 + $0x1f8] sm:$0xff]
    %v180 = vld [vmem:[#allocation5 + $0x200] sm:$0xf]
    %v181 = vld [vmem:[#allocation5 + $0x204] sm:$0xff]
    %v182 = vld [vmem:[#allocation5 + $0x20c] sm:$0xf]
    %v183 = vld [vmem:[#allocation5 + $0x210] sm:$0xff]
    %v184 = vld [vmem:[#allocation5 + $0x218] sm:$0xf]
    %v185 = vld [vmem:[#allocation5 + $0x21c] sm:$0xff]
    %v186 = vld [vmem:[#allocation5 + $0x224] sm:$0xf]
    %v187 = vld [vmem:[#allocation5 + $0x228] sm:$0xff]
    %v188 = vld [vmem:[#allocation5 + $0x230] sm:$0xf]
    %v189 = vld [vmem:[#allocation5 + $0x234] sm:$0xff]
    %v190 = vld [vmem:[#allocation5 + $0x23c] sm:$0xf]
    %v191 = vld [vmem:[#allocation5 + $0x240] sm:$0xff]
    %v192 = vld [vmem:[#allocation5 + $0x248] sm:$0xf]
    %v193 = vld [vmem:[#allocation5 + $0x24c] sm:$0xff]
    %v194 = vld [vmem:[#allocation5 + $0x254] sm:$0xf]
    %v195 = vld [vmem:[#allocation5 + $0x258] sm:$0xff]
    %v196 = vld [vmem:[#allocation5 + $0x260] sm:$0xf]
    %v197 = vld [vmem:[#allocation5 + $0x264] sm:$0xff]
    %v198 = vld [vmem:[#allocation5 + $0x26c] sm:$0xf]
    %v199 = vld [vmem:[#allocation5 + $0x270] sm:$0xff]
    %v200 = vld [vmem:[#allocation5 + $0x278] sm:$0xf]
    %v201 = vld [vmem:[#allocation5 + $0x27c] sm:$0xff]
    %v202 = vld [vmem:[#allocation5 + $0x284] sm:$0xf]
    %v203 = vld [vmem:[#allocation5 + $0x288] sm:$0xff]
    %v204 = vld [vmem:[#allocation5 + $0x290] sm:$0xf]
    %v205 = vld [vmem:[#allocation5 + $0x294] sm:$0xff]
    %v206 = vld [vmem:[#allocation5 + $0x29c] sm:$0xf]
    %v207 = vld [vmem:[#allocation5 + $0x2a0] sm:$0xff]
    %v208 = vld [vmem:[#allocation5 + $0x2a8] sm:$0xf]
    %v209 = vld [vmem:[#allocation5 + $0x2ac] sm:$0xff]
    %v210 = vld [vmem:[#allocation5 + $0x2b4] sm:$0xf]
    %v211 = vld [vmem:[#allocation5 + $0x2b8] sm:$0xff]
    %v212 = vld [vmem:[#allocation5 + $0x2c0] sm:$0xf]
    %v213 = vld [vmem:[#allocation5 + $0x2c4] sm:$0xff]
    %v214 = vld [vmem:[#allocation5 + $0x2cc] sm:$0xf]
    %v215 = vld [vmem:[#allocation5 + $0x2d0] sm:$0xff]
    %v216 = vld [vmem:[#allocation5 + $0x2d8] sm:$0xf]
    %v217 = vld [vmem:[#allocation5 + $0x2dc] sm:$0xff]
    %v218 = vld [vmem:[#allocation5 + $0x2e4] sm:$0xf]
    %v219 = vld [vmem:[#allocation5 + $0x2e8] sm:$0xff]
    %v220 = vld [vmem:[#allocation5 + $0x2f0] sm:$0xf]
    %v221 = vld [vmem:[#allocation5 + $0x2f4] sm:$0xff]
    %v222 = vld [vmem:[#allocation5 + $0x2fc] sm:$0xf]
    %v223 = vld [vmem:[#allocation5 + $0x300] sm:$0xff]
    %v224 = vld [vmem:[#allocation5 + $0x308] sm:$0xf]
    %v225 = vld [vmem:[#allocation5 + $0x30c] sm:$0xff]
    %v226 = vld [vmem:[#allocation5 + $0x314] sm:$0xf]
    %v227 = vld [vmem:[#allocation5 + $0x318] sm:$0xff]
    %v228 = vld [vmem:[#allocation5 + $0x320] sm:$0xf]
    %v229 = vld [vmem:[#allocation5 + $0x324] sm:$0xff]
    %v230 = vld [vmem:[#allocation5 + $0x32c] sm:$0xf]
    %v231 = vld [vmem:[#allocation5 + $0x330] sm:$0xff]
    %v232 = vld [vmem:[#allocation5 + $0x338] sm:$0xf]
    %v233 = vld [vmem:[#allocation5 + $0x33c] sm:$0xff]
    %v234 = vld [vmem:[#allocation5 + $0x344] sm:$0xf]
    %v235 = vld [vmem:[#allocation5 + $0x348] sm:$0xff]
    %v236 = vld [vmem:[#allocation5 + $0x350] sm:$0xf]
    %v237 = vld [vmem:[#allocation5 + $0x354] sm:$0xff]
    %v238 = vld [vmem:[#allocation5 + $0x35c] sm:$0xf]
    %v239 = vld [vmem:[#allocation5 + $0x360] sm:$0xff]
    %v240 = vld [vmem:[#allocation5 + $0x368] sm:$0xf]
    %v241 = vld [vmem:[#allocation5 + $0x36c] sm:$0xff]
    %v242 = vld [vmem:[#allocation5 + $0x374] sm:$0xf]
    %v243 = vld [vmem:[#allocation5 + $0x378] sm:$0xff]
    %v244 = vld [vmem:[#allocation5 + $0x380] sm:$0xf]
    %v245 = vld [vmem:[#allocation5 + $0x384] sm:$0xff]
    %v246 = vld [vmem:[#allocation5 + $0x38c] sm:$0xf]
    %v247 = vld [vmem:[#allocation5 + $0x390] sm:$0xff]
    %v248 = vld [vmem:[#allocation5 + $0x398] sm:$0xf]
    %v249 = vld [vmem:[#allocation5 + $0x39c] sm:$0xff]
    %v250 = vld [vmem:[#allocation5 + $0x3a4] sm:$0xf]
    %v251 = vld [vmem:[#allocation5 + $0x3a8] sm:$0xff]
    %v252 = vld [vmem:[#allocation5 + $0x3b0] sm:$0xf]
    %v253 = vld [vmem:[#allocation5 + $0x3b4] sm:$0xff]
    %v254 = vld [vmem:[#allocation5 + $0x3bc] sm:$0xf]
    %v255 = vld [vmem:[#allocation5 + $0x3c0] sm:$0xff]
    %v256 = vld [vmem:[#allocation5 + $0x3c8] sm:$0xf]
    %v257 = vld [vmem:[#allocation5 + $0x3cc] sm:$0xff]
    %v258 = vld [vmem:[#allocation5 + $0x3d4] sm:$0xf]
    %v259 = vld [vmem:[#allocation5 + $0x3d8] sm:$0xff]
    %v260 = vld [vmem:[#allocation5 + $0x3e0] sm:$0xf]
    %v261 = vld [vmem:[#allocation5 + $0x3e4] sm:$0xff]
    %v262 = vld [vmem:[#allocation5 + $0x3ec] sm:$0xf]
    %v263 = vld [vmem:[#allocation5 + $0x3f0] sm:$0xff]
    %v264 = vld [vmem:[#allocation5 + $0x3f8] sm:$0xf]
    %v265 = vld [vmem:[#allocation5 + $0x3fc] sm:$0xff]
    %v266 = vld [vmem:[#allocation5 + $0x404] sm:$0xf]
    %v267 = vld [vmem:[#allocation5 + $0x408] sm:$0xff]
    %v268 = vld [vmem:[#allocation5 + $0x410] sm:$0xf]
    %v269 = vld [vmem:[#allocation5 + $0x414] sm:$0xff]
    %v270 = vld [vmem:[#allocation5 + $0x41c] sm:$0xf]
    %v271 = vld [vmem:[#allocation5 + $0x420] sm:$0xff]
    %v272 = vld [vmem:[#allocation5 + $0x428] sm:$0xf]
    %v273 = vld [vmem:[#allocation5 + $0x42c] sm:$0xff]
    %v274 = vld [vmem:[#allocation5 + $0x434] sm:$0xf]
    %v275 = vld [vmem:[#allocation5 + $0x438] sm:$0xff]
    %v276 = vld [vmem:[#allocation5 + $0x440] sm:$0xf]
    %v277 = vld [vmem:[#allocation5 + $0x444] sm:$0xff]
    %v278 = vld [vmem:[#allocation5 + $0x44c] sm:$0xf]
    %v279 = vld [vmem:[#allocation5 + $0x450] sm:$0xff]
    %v280 = vld [vmem:[#allocation5 + $0x458] sm:$0xf]
    %v281 = vld [vmem:[#allocation5 + $0x45c] sm:$0xff]
    %v282 = vld [vmem:[#allocation5 + $0x464] sm:$0xf]
    %v283 = vld [vmem:[#allocation5 + $0x468] sm:$0xff]
    %v284 = vld [vmem:[#allocation5 + $0x470] sm:$0xf]
    %v285 = vld [vmem:[#allocation5 + $0x474] sm:$0xff]
    %v286 = vld [vmem:[#allocation5 + $0x47c] sm:$0xf]
    %v287 = vld [vmem:[#allocation5 + $0x480] sm:$0xff]
    %v288 = vld [vmem:[#allocation5 + $0x488] sm:$0xf]
    %v289 = vld [vmem:[#allocation5 + $0x48c] sm:$0xff]
    %v290 = vld [vmem:[#allocation5 + $0x494] sm:$0xf]
    %v291 = vld [vmem:[#allocation7] sm:$0x7]
    %v293 = vperm.slane %v291, 0
    %v294 = vperm.slane %v291, 1
    %v295 = vperm.slane %v291, 2
    %v495 = vunpack.c.l.b16 %v95
    %v496 = vunpack.c.h.b16 %v95
    %v497 = vunpack.c.l.b16 %v96
    %v498 = vunpack.c.l.b16 %v97
    %v499 = vunpack.c.h.b16 %v97
    %v500 = vunpack.c.l.b16 %v98
    %v501 = vunpack.c.l.b16 %v99
    %v502 = vunpack.c.h.b16 %v99
    %v503 = vunpack.c.l.b16 %v100
    %v504 = vunpack.c.l.b16 %v101
    %v505 = vunpack.c.h.b16 %v101
    %v506 = vunpack.c.l.b16 %v102
    %v507 = vunpack.c.l.b16 %v103
    %v508 = vunpack.c.h.b16 %v103
    %v509 = vunpack.c.l.b16 %v104
    %v510 = vunpack.c.l.b16 %v105
    %v511 = vunpack.c.h.b16 %v105
    %v512 = vunpack.c.l.b16 %v106
    %v513 = vunpack.c.l.b16 %v107
    %v514 = vunpack.c.h.b16 %v107
    %v515 = vunpack.c.l.b16 %v108
    %v516 = vunpack.c.l.b16 %v109
    %v517 = vunpack.c.h.b16 %v109
    %v518 = vunpack.c.l.b16 %v110
    %v519 = vunpack.c.l.b16 %v111
    %v520 = vunpack.c.h.b16 %v111
    %v521 = vunpack.c.l.b16 %v112
    %v522 = vunpack.c.l.b16 %v113
    %v523 = vunpack.c.h.b16 %v113
    %v524 = vunpack.c.l.b16 %v114
    %v525 = vunpack.c.l.b16 %v115
    %v526 = vunpack.c.h.b16 %v115
    %v527 = vunpack.c.l.b16 %v116
    %v528 = vunpack.c.l.b16 %v117
    %v529 = vunpack.c.h.b16 %v117
    %v530 = vunpack.c.l.b16 %v118
    %v531 = vunpack.c.l.b16 %v119
    %v532 = vunpack.c.h.b16 %v119
    %v533 = vunpack.c.l.b16 %v120
    %v534 = vunpack.c.l.b16 %v121
    %v535 = vunpack.c.h.b16 %v121
    %v536 = vunpack.c.l.b16 %v122
    %v537 = vunpack.c.l.b16 %v123
    %v538 = vunpack.c.h.b16 %v123
    %v539 = vunpack.c.l.b16 %v124
    %v540 = vunpack.c.l.b16 %v125
    %v541 = vunpack.c.h.b16 %v125
    %v542 = vunpack.c.l.b16 %v126
    %v543 = vunpack.c.l.b16 %v127
    %v544 = vunpack.c.h.b16 %v127
    %v545 = vunpack.c.l.b16 %v128
    %v546 = vunpack.c.l.b16 %v129
    %v547 = vunpack.c.h.b16 %v129
    %v548 = vunpack.c.l.b16 %v130
    %v549 = vunpack.c.l.b16 %v131
    %v550 = vunpack.c.h.b16 %v131
    %v551 = vunpack.c.l.b16 %v132
    %v552 = vunpack.c.l.b16 %v133
    %v553 = vunpack.c.h.b16 %v133
    %v554 = vunpack.c.l.b16 %v134
    %v555 = vunpack.c.l.b16 %v135
    %v556 = vunpack.c.h.b16 %v135
    %v557 = vunpack.c.l.b16 %v136
    %v558 = vunpack.c.l.b16 %v137
    %v559 = vunpack.c.h.b16 %v137
    %v560 = vunpack.c.l.b16 %v138
    %v561 = vunpack.c.l.b16 %v139
    %v562 = vunpack.c.h.b16 %v139
    %v563 = vunpack.c.l.b16 %v140
    %v564 = vunpack.c.l.b16 %v141
    %v565 = vunpack.c.h.b16 %v141
    %v566 = vunpack.c.l.b16 %v142
    %v567 = vunpack.c.l.b16 %v143
    %v568 = vunpack.c.h.b16 %v143
    %v569 = vunpack.c.l.b16 %v144
    %v570 = vunpack.c.l.b16 %v145
    %v571 = vunpack.c.h.b16 %v145
    %v572 = vunpack.c.l.b16 %v146
    %v573 = vunpack.c.l.b16 %v147
    %v574 = vunpack.c.h.b16 %v147
    %v575 = vunpack.c.l.b16 %v148
    %v576 = vunpack.c.l.b16 %v149
    %v577 = vunpack.c.h.b16 %v149
    %v578 = vunpack.c.l.b16 %v150
    %v579 = vunpack.c.l.b16 %v151
    %v580 = vunpack.c.h.b16 %v151
    %v581 = vunpack.c.l.b16 %v152
    %v582 = vunpack.c.l.b16 %v153
    %v583 = vunpack.c.h.b16 %v153
    %v584 = vunpack.c.l.b16 %v154
    %v585 = vunpack.c.l.b16 %v155
    %v586 = vunpack.c.h.b16 %v155
    %v587 = vunpack.c.l.b16 %v156
    %v588 = vunpack.c.l.b16 %v157
    %v589 = vunpack.c.h.b16 %v157
    %v590 = vunpack.c.l.b16 %v158
    %v591 = vunpack.c.l.b16 %v159
    %v592 = vunpack.c.h.b16 %v159
    %v593 = vunpack.c.l.b16 %v160
    %v594 = vunpack.c.l.b16 %v161
    %v595 = vunpack.c.h.b16 %v161
    %v596 = vunpack.c.l.b16 %v162
    %v597 = vunpack.c.l.b16 %v163
    %v598 = vunpack.c.h.b16 %v163
    %v599 = vunpack.c.l.b16 %v164
    %v600 = vunpack.c.l.b16 %v165
    %v601 = vunpack.c.h.b16 %v165
    %v602 = vunpack.c.l.b16 %v166
    %v603 = vunpack.c.l.b16 %v167
    %v604 = vunpack.c.h.b16 %v167
    %v605 = vunpack.c.l.b16 %v168
    %v606 = vunpack.c.l.b16 %v169
    %v607 = vunpack.c.h.b16 %v169
    %v608 = vunpack.c.l.b16 %v170
    %v609 = vunpack.c.l.b16 %v171
    %v610 = vunpack.c.h.b16 %v171
    %v611 = vunpack.c.l.b16 %v172
    %v612 = vunpack.c.l.b16 %v173
    %v613 = vunpack.c.h.b16 %v173
    %v614 = vunpack.c.l.b16 %v174
    %v615 = vunpack.c.l.b16 %v175
    %v616 = vunpack.c.h.b16 %v175
    %v617 = vunpack.c.l.b16 %v176
    %v618 = vunpack.c.l.b16 %v177
    %v619 = vunpack.c.h.b16 %v177
    %v620 = vunpack.c.l.b16 %v178
    %v621 = vunpack.c.l.b16 %v179
    %v622 = vunpack.c.h.b16 %v179
    %v623 = vunpack.c.l.b16 %v180
    %v624 = vunpack.c.l.b16 %v181
    %v625 = vunpack.c.h.b16 %v181
    %v626 = vunpack.c.l.b16 %v182
    %v627 = vunpack.c.l.b16 %v183
    %v628 = vunpack.c.h.b16 %v183
    %v629 = vunpack.c.l.b16 %v184
    %v630 = vunpack.c.l.b16 %v185
    %v631 = vunpack.c.h.b16 %v185
    %v632 = vunpack.c.l.b16 %v186
    %v633 = vunpack.c.l.b16 %v187
    %v634 = vunpack.c.h.b16 %v187
    %v635 = vunpack.c.l.b16 %v188
    %v636 = vunpack.c.l.b16 %v189
    %v637 = vunpack.c.h.b16 %v189
    %v638 = vunpack.c.l.b16 %v190
    %v639 = vunpack.c.l.b16 %v191
    %v640 = vunpack.c.h.b16 %v191
    %v641 = vunpack.c.l.b16 %v192
    %v642 = vunpack.c.l.b16 %v193
    %v643 = vunpack.c.h.b16 %v193
    %v644 = vunpack.c.l.b16 %v194
    %v645 = vunpack.c.l.b16 %v195
    %v646 = vunpack.c.h.b16 %v195
    %v647 = vunpack.c.l.b16 %v196
    %v648 = vunpack.c.l.b16 %v197
    %v649 = vunpack.c.h.b16 %v197
    %v650 = vunpack.c.l.b16 %v198
    %v651 = vunpack.c.l.b16 %v199
    %v652 = vunpack.c.h.b16 %v199
    %v653 = vunpack.c.l.b16 %v200
    %v654 = vunpack.c.l.b16 %v201
    %v655 = vunpack.c.h.b16 %v201
    %v656 = vunpack.c.l.b16 %v202
    %v657 = vunpack.c.l.b16 %v203
    %v658 = vunpack.c.h.b16 %v203
    %v659 = vunpack.c.l.b16 %v204
    %v660 = vunpack.c.l.b16 %v205
    %v661 = vunpack.c.h.b16 %v205
    %v662 = vunpack.c.l.b16 %v206
    %v663 = vunpack.c.l.b16 %v207
    %v664 = vunpack.c.h.b16 %v207
    %v665 = vunpack.c.l.b16 %v208
    %v666 = vunpack.c.l.b16 %v209
    %v667 = vunpack.c.h.b16 %v209
    %v668 = vunpack.c.l.b16 %v210
    %v669 = vunpack.c.l.b16 %v211
    %v670 = vunpack.c.h.b16 %v211
    %v671 = vunpack.c.l.b16 %v212
    %v672 = vunpack.c.l.b16 %v213
    %v673 = vunpack.c.h.b16 %v213
    %v674 = vunpack.c.l.b16 %v214
    %v675 = vunpack.c.l.b16 %v215
    %v676 = vunpack.c.h.b16 %v215
    %v677 = vunpack.c.l.b16 %v216
    %v678 = vunpack.c.l.b16 %v217
    %v679 = vunpack.c.h.b16 %v217
    %v680 = vunpack.c.l.b16 %v218
    %v681 = vunpack.c.l.b16 %v219
    %v682 = vunpack.c.h.b16 %v219
    %v683 = vunpack.c.l.b16 %v220
    %v684 = vunpack.c.l.b16 %v221
    %v685 = vunpack.c.h.b16 %v221
    %v686 = vunpack.c.l.b16 %v222
    %v687 = vunpack.c.l.b16 %v223
    %v688 = vunpack.c.h.b16 %v223
    %v689 = vunpack.c.l.b16 %v224
    %v690 = vunpack.c.l.b16 %v225
    %v691 = vunpack.c.h.b16 %v225
    %v692 = vunpack.c.l.b16 %v226
    %v693 = vunpack.c.l.b16 %v227
    %v694 = vunpack.c.h.b16 %v227
    %v695 = vunpack.c.l.b16 %v228
    %v696 = vunpack.c.l.b16 %v229
    %v697 = vunpack.c.h.b16 %v229
    %v698 = vunpack.c.l.b16 %v230
    %v699 = vunpack.c.l.b16 %v231
    %v700 = vunpack.c.h.b16 %v231
    %v701 = vunpack.c.l.b16 %v232
    %v702 = vunpack.c.l.b16 %v233
    %v703 = vunpack.c.h.b16 %v233
    %v704 = vunpack.c.l.b16 %v234
    %v705 = vunpack.c.l.b16 %v235
    %v706 = vunpack.c.h.b16 %v235
    %v707 = vunpack.c.l.b16 %v236
    %v708 = vunpack.c.l.b16 %v237
    %v709 = vunpack.c.h.b16 %v237
    %v710 = vunpack.c.l.b16 %v238
    %v711 = vunpack.c.l.b16 %v239
    %v712 = vunpack.c.h.b16 %v239
    %v713 = vunpack.c.l.b16 %v240
    %v714 = vunpack.c.l.b16 %v241
    %v715 = vunpack.c.h.b16 %v241
    %v716 = vunpack.c.l.b16 %v242
    %v717 = vunpack.c.l.b16 %v243
    %v718 = vunpack.c.h.b16 %v243
    %v719 = vunpack.c.l.b16 %v244
    %v720 = vunpack.c.l.b16 %v245
    %v721 = vunpack.c.h.b16 %v245
    %v722 = vunpack.c.l.b16 %v246
    %v723 = vunpack.c.l.b16 %v247
    %v724 = vunpack.c.h.b16 %v247
    %v725 = vunpack.c.l.b16 %v248
    %v726 = vunpack.c.l.b16 %v249
    %v727 = vunpack.c.h.b16 %v249
    %v728 = vunpack.c.l.b16 %v250
    %v729 = vunpack.c.l.b16 %v251
    %v730 = vunpack.c.h.b16 %v251
    %v731 = vunpack.c.l.b16 %v252
    %v732 = vunpack.c.l.b16 %v253
    %v733 = vunpack.c.h.b16 %v253
    %v734 = vunpack.c.l.b16 %v254
    %v735 = vunpack.c.l.b16 %v255
    %v736 = vunpack.c.h.b16 %v255
    %v737 = vunpack.c.l.b16 %v256
    %v738 = vunpack.c.l.b16 %v257
    %v739 = vunpack.c.h.b16 %v257
    %v740 = vunpack.c.l.b16 %v258
    %v741 = vunpack.c.l.b16 %v259
    %v742 = vunpack.c.h.b16 %v259
    %v743 = vunpack.c.l.b16 %v260
    %v744 = vunpack.c.l.b16 %v261
    %v745 = vunpack.c.h.b16 %v261
    %v746 = vunpack.c.l.b16 %v262
    %v747 = vunpack.c.l.b16 %v263
    %v748 = vunpack.c.h.b16 %v263
    %v749 = vunpack.c.l.b16 %v264
    %v750 = vunpack.c.l.b16 %v265
    %v751 = vunpack.c.h.b16 %v265
    %v752 = vunpack.c.l.b16 %v266
    %v753 = vunpack.c.l.b16 %v267
    %v754 = vunpack.c.h.b16 %v267
    %v755 = vunpack.c.l.b16 %v268
    %v756 = vunpack.c.l.b16 %v269
    %v757 = vunpack.c.h.b16 %v269
    %v758 = vunpack.c.l.b16 %v270
    %v759 = vunpack.c.l.b16 %v271
    %v760 = vunpack.c.h.b16 %v271
    %v761 = vunpack.c.l.b16 %v272
    %v762 = vunpack.c.l.b16 %v273
    %v763 = vunpack.c.h.b16 %v273
    %v764 = vunpack.c.l.b16 %v274
    %v765 = vunpack.c.l.b16 %v275
    %v766 = vunpack.c.h.b16 %v275
    %v767 = vunpack.c.l.b16 %v276
    %v768 = vunpack.c.l.b16 %v277
    %v769 = vunpack.c.h.b16 %v277
    %v770 = vunpack.c.l.b16 %v278
    %v771 = vunpack.c.l.b16 %v279
    %v772 = vunpack.c.h.b16 %v279
    %v773 = vunpack.c.l.b16 %v280
    %v774 = vunpack.c.l.b16 %v281
    %v775 = vunpack.c.h.b16 %v281
    %v776 = vunpack.c.l.b16 %v282
    %v777 = vunpack.c.l.b16 %v283
    %v778 = vunpack.c.h.b16 %v283
    %v779 = vunpack.c.l.b16 %v284
    %v780 = vunpack.c.l.b16 %v285
    %v781 = vunpack.c.h.b16 %v285
    %v782 = vunpack.c.l.b16 %v286
    %v783 = vunpack.c.l.b16 %v287
    %v784 = vunpack.c.h.b16 %v287
    %v785 = vunpack.c.l.b16 %v288
    %v786 = vunpack.c.l.b16 %v289
    %v787 = vunpack.c.h.b16 %v289
    %v788 = vunpack.c.l.b16 %v290
    %v789 = vpack.c.b16 %v498, %v495
    %v790 = vpack.c.b16 %v499, %v496
    %v791 = vpack.c.b16 %v500, %v497
    %v792 = vpack.c.b16 %v504, %v501
    %v793 = vpack.c.b16 %v505, %v502
    %v794 = vpack.c.b16 %v506, %v503
    %v795 = vpack.c.b16 %v510, %v507
    %v796 = vpack.c.b16 %v511, %v508
    %v797 = vpack.c.b16 %v512, %v509
    %v798 = vpack.c.b16 %v516, %v513
    %v799 = vpack.c.b16 %v517, %v514
    %v800 = vpack.c.b16 %v518, %v515
    %v801 = vpack.c.b16 %v522, %v519
    %v802 = vpack.c.b16 %v523, %v520
    %v803 = vpack.c.b16 %v524, %v521
    %v804 = vpack.c.b16 %v528, %v525
    %v805 = vpack.c.b16 %v529, %v526
    %v806 = vpack.c.b16 %v530, %v527
    %v807 = vpack.c.b16 %v534, %v531
    %v808 = vpack.c.b16 %v535, %v532
    %v809 = vpack.c.b16 %v536, %v533
    %v810 = vpack.c.b16 %v540, %v537
    %v811 = vpack.c.b16 %v541, %v538
    %v812 = vpack.c.b16 %v542, %v539
    %v813 = vpack.c.b16 %v546, %v543
    %v814 = vpack.c.b16 %v547, %v544
    %v815 = vpack.c.b16 %v548, %v545
    %v816 = vpack.c.b16 %v552, %v549
    %v817 = vpack.c.b16 %v553, %v550
    %v818 = vpack.c.b16 %v554, %v551
    %v819 = vpack.c.b16 %v558, %v555
    %v820 = vpack.c.b16 %v559, %v556
    %v821 = vpack.c.b16 %v560, %v557
    %v822 = vpack.c.b16 %v564, %v561
    %v823 = vpack.c.b16 %v565, %v562
    %v824 = vpack.c.b16 %v566, %v563
    %v825 = vpack.c.b16 %v570, %v567
    %v826 = vpack.c.b16 %v571, %v568
    %v827 = vpack.c.b16 %v572, %v569
    %v828 = vpack.c.b16 %v576, %v573
    %v829 = vpack.c.b16 %v577, %v574
    %v830 = vpack.c.b16 %v578, %v575
    %v831 = vpack.c.b16 %v582, %v579
    %v832 = vpack.c.b16 %v583, %v580
    %v833 = vpack.c.b16 %v584, %v581
    %v834 = vpack.c.b16 %v588, %v585
    %v835 = vpack.c.b16 %v589, %v586
    %v836 = vpack.c.b16 %v590, %v587
    %v837 = vpack.c.b16 %v594, %v591
    %v838 = vpack.c.b16 %v595, %v592
    %v839 = vpack.c.b16 %v596, %v593
    %v840 = vpack.c.b16 %v600, %v597
    %v841 = vpack.c.b16 %v601, %v598
    %v842 = vpack.c.b16 %v602, %v599
    %v843 = vpack.c.b16 %v606, %v603
    %v844 = vpack.c.b16 %v607, %v604
    %v845 = vpack.c.b16 %v608, %v605
    %v846 = vpack.c.b16 %v612, %v609
    %v847 = vpack.c.b16 %v613, %v610
    %v848 = vpack.c.b16 %v614, %v611
    %v849 = vpack.c.b16 %v618, %v615
    %v850 = vpack.c.b16 %v619, %v616
    %v851 = vpack.c.b16 %v620, %v617
    %v852 = vpack.c.b16 %v624, %v621
    %v853 = vpack.c.b16 %v625, %v622
    %v854 = vpack.c.b16 %v626, %v623
    %v855 = vpack.c.b16 %v630, %v627
    %v856 = vpack.c.b16 %v631, %v628
    %v857 = vpack.c.b16 %v632, %v629
    %v858 = vpack.c.b16 %v636, %v633
    %v859 = vpack.c.b16 %v637, %v634
    %v860 = vpack.c.b16 %v638, %v635
    %v861 = vpack.c.b16 %v642, %v639
    %v862 = vpack.c.b16 %v643, %v640
    %v863 = vpack.c.b16 %v644, %v641
    %v864 = vpack.c.b16 %v648, %v645
    %v865 = vpack.c.b16 %v649, %v646
    %v866 = vpack.c.b16 %v650, %v647
    %v867 = vpack.c.b16 %v654, %v651
    %v868 = vpack.c.b16 %v655, %v652
    %v869 = vpack.c.b16 %v656, %v653
    %v870 = vpack.c.b16 %v660, %v657
    %v871 = vpack.c.b16 %v661, %v658
    %v872 = vpack.c.b16 %v662, %v659
    %v873 = vpack.c.b16 %v666, %v663
    %v874 = vpack.c.b16 %v667, %v664
    %v875 = vpack.c.b16 %v668, %v665
    %v876 = vpack.c.b16 %v672, %v669
    %v877 = vpack.c.b16 %v673, %v670
    %v878 = vpack.c.b16 %v674, %v671
    %v879 = vpack.c.b16 %v678, %v675
    %v880 = vpack.c.b16 %v679, %v676
    %v881 = vpack.c.b16 %v680, %v677
    %v882 = vpack.c.b16 %v684, %v681
    %v883 = vpack.c.b16 %v685, %v682
    %v884 = vpack.c.b16 %v686, %v683
    %v885 = vpack.c.b16 %v690, %v687
    %v886 = vpack.c.b16 %v691, %v688
    %v887 = vpack.c.b16 %v692, %v689
    %v888 = vpack.c.b16 %v696, %v693
    %v889 = vpack.c.b16 %v697, %v694
    %v890 = vpack.c.b16 %v698, %v695
    %v891 = vpack.c.b16 %v702, %v699
    %v892 = vpack.c.b16 %v703, %v700
    %v893 = vpack.c.b16 %v704, %v701
    %v894 = vpack.c.b16 %v708, %v705
    %v895 = vpack.c.b16 %v709, %v706
    %v896 = vpack.c.b16 %v710, %v707
    %v897 = vpack.c.b16 %v714, %v711
    %v898 = vpack.c.b16 %v715, %v712
    %v899 = vpack.c.b16 %v716, %v713
    %v900 = vpack.c.b16 %v720, %v717
    %v901 = vpack.c.b16 %v721, %v718
    %v902 = vpack.c.b16 %v722, %v719
    %v903 = vpack.c.b16 %v726, %v723
    %v904 = vpack.c.b16 %v727, %v724
    %v905 = vpack.c.b16 %v728, %v725
    %v906 = vpack.c.b16 %v732, %v729
    %v907 = vpack.c.b16 %v733, %v730
    %v908 = vpack.c.b16 %v734, %v731
    %v909 = vpack.c.b16 %v738, %v735
    %v910 = vpack.c.b16 %v739, %v736
    %v911 = vpack.c.b16 %v740, %v737
    %v912 = vpack.c.b16 %v744, %v741
    %v913 = vpack.c.b16 %v745, %v742
    %v914 = vpack.c.b16 %v746, %v743
    %v915 = vpack.c.b16 %v750, %v747
    %v916 = vpack.c.b16 %v751, %v748
    %v917 = vpack.c.b16 %v752, %v749
    %v918 = vpack.c.b16 %v756, %v753
    %v919 = vpack.c.b16 %v757, %v754
    %v920 = vpack.c.b16 %v758, %v755
    %v921 = vpack.c.b16 %v762, %v759
    %v922 = vpack.c.b16 %v763, %v760
    %v923 = vpack.c.b16 %v764, %v761
    %v924 = vpack.c.b16 %v768, %v765
    %v925 = vpack.c.b16 %v769, %v766
    %v926 = vpack.c.b16 %v770, %v767
    %v927 = vpack.c.b16 %v774, %v771
    %v928 = vpack.c.b16 %v775, %v772
    %v929 = vpack.c.b16 %v776, %v773
    %v930 = vpack.c.b16 %v780, %v777
    %v931 = vpack.c.b16 %v781, %v778
    %v932 = vpack.c.b16 %v782, %v779
    %v933 = vpack.c.b16 %v786, %v783
    %v934 = vpack.c.b16 %v787, %v784
    %v935 = vpack.c.b16 %v788, %v785
    %vm1083 = vcmask 130048
    %v1085 = vsel %vm1083, %v94, 0
    %1087 = vmatpush.bf16.msra.mxu0 %v810
    %1088 = vmatpush.bf16.msra.mxu0 %v807
    %1089 = vmatpush.bf16.msra.mxu0 %v804
    %1090 = vmatpush.bf16.msra.mxu0 %v801
    %1091 = vmatpush.bf16.msra.mxu0 %v798
    %1092 = vmatpush.bf16.msra.mxu0 %v795
    %1093 = vmatpush.bf16.msra.mxu0 %v792
    %1094 = vmatpush.bf16.msra.mxu0 %v789
    %1095 = vmatmul.bf16.gmra.mxu0 %v88
    %v1096 = vpop.f32.mrf.mxu0
    %v1097 = vadd.f32 %v293, %v1096
    %v1098 = vpop.f32.mrf.mxu0
    %1099 = vdwg.mxu0
    %1100 = vmatpush.bf16.msra.mxu0 %v834
    %1101 = vmatpush.bf16.msra.mxu0 %v831
    %1102 = vmatpush.bf16.msra.mxu0 %v828
    %1103 = vmatpush.bf16.msra.mxu0 %v825
    %1104 = vmatpush.bf16.msra.mxu0 %v822
    %1105 = vmatpush.bf16.msra.mxu0 %v819
    %1106 = vmatpush.bf16.msra.mxu0 %v816
    %1107 = vmatpush.bf16.msra.mxu0 %v813
    %1108 = vmatmul.bf16.gmra.mxu0 %v89
    %v1109 = vpop.f32.mrf.mxu0
    %v1110 = vadd.f32 %v1097, %v1109
    %v1111 = vpop.f32.mrf.mxu0
    %1112 = vdwg.mxu0
    %1113 = vmatpush.bf16.msra.mxu0 %v858
    %1114 = vmatpush.bf16.msra.mxu0 %v855
    %1115 = vmatpush.bf16.msra.mxu0 %v852
    %1116 = vmatpush.bf16.msra.mxu0 %v849
    %1117 = vmatpush.bf16.msra.mxu0 %v846
    %1118 = vmatpush.bf16.msra.mxu0 %v843
    %1119 = vmatpush.bf16.msra.mxu0 %v840
    %1120 = vmatpush.bf16.msra.mxu0 %v837
    %1121 = vmatmul.bf16.gmra.mxu0 %v90
    %v1122 = vpop.f32.mrf.mxu0
    %v1123 = vadd.f32 %v1110, %v1122
    %v1124 = vpop.f32.mrf.mxu0
    %1125 = vdwg.mxu0
    %1126 = vmatpush.bf16.msra.mxu0 %v882
    %1127 = vmatpush.bf16.msra.mxu0 %v879
    %1128 = vmatpush.bf16.msra.mxu0 %v876
    %1129 = vmatpush.bf16.msra.mxu0 %v873
    %1130 = vmatpush.bf16.msra.mxu0 %v870
    %1131 = vmatpush.bf16.msra.mxu0 %v867
    %1132 = vmatpush.bf16.msra.mxu0 %v864
    %1133 = vmatpush.bf16.msra.mxu0 %v861
    %1134 = vmatmul.bf16.gmra.mxu0 %v91
    %v1135 = vpop.f32.mrf.mxu0
    %v1136 = vadd.f32 %v1123, %v1135
    %v1137 = vpop.f32.mrf.mxu0
    %1138 = vdwg.mxu0
    %1139 = vmatpush.bf16.msra.mxu0 %v906
    %1140 = vmatpush.bf16.msra.mxu0 %v903
    %1141 = vmatpush.bf16.msra.mxu0 %v900
    %1142 = vmatpush.bf16.msra.mxu0 %v897
    %1143 = vmatpush.bf16.msra.mxu0 %v894
    %1144 = vmatpush.bf16.msra.mxu0 %v891
    %1145 = vmatpush.bf16.msra.mxu0 %v888
    %1146 = vmatpush.bf16.msra.mxu0 %v885
    %1147 = vmatmul.bf16.gmra.mxu0 %v92
    %v1148 = vpop.f32.mrf.mxu0
    %v1149 = vadd.f32 %v1136, %v1148
    %v1150 = vpop.f32.mrf.mxu0
    %1151 = vdwg.mxu0
    %1152 = vmatpush.bf16.msra.mxu0 %v930
    %1153 = vmatpush.bf16.msra.mxu0 %v927
    %1154 = vmatpush.bf16.msra.mxu0 %v924
    %1155 = vmatpush.bf16.msra.mxu0 %v921
    %1156 = vmatpush.bf16.msra.mxu0 %v918
    %1157 = vmatpush.bf16.msra.mxu0 %v915
    %1158 = vmatpush.bf16.msra.mxu0 %v912
    %1159 = vmatpush.bf16.msra.mxu0 %v909
    %1160 = vmatmul.bf16.gmra.mxu0 %v93
    %v1161 = vpop.f32.mrf.mxu0
    %v1162 = vadd.f32 %v1149, %v1161
    %v1163 = vpop.f32.mrf.mxu0
    %1164 = vdwg.mxu0
    %1165 = vmatpush.bf16.msra.mxu0 0
    %1166 = vmatpush.bf16.msra.mxu0 0
    %1167 = vmatpush.bf16.msra.mxu0 0
    %1168 = vmatpush.bf16.msra.mxu0 0
    %1169 = vmatpush.bf16.msra.mxu0 0
    %1170 = vmatpush.bf16.msra.mxu0 0
    %1171 = vmatpush.bf16.msra.mxu0 0
    %1172 = vmatpush.bf16.msra.mxu0 %v933
    %1173 = vmatmul.bf16.gmra.mxu0 %v1085
    %v1174 = vpop.f32.mrf.mxu0
    %v1175 = vadd.f32 %v1162, %v1174
    %v1176 = vpop.f32.mrf.mxu0
    %1177 = vdwg.mxu0
    %1178 = vmatpush.bf16.msra.mxu0 %v811
    %1179 = vmatpush.bf16.msra.mxu0 %v808
    %1180 = vmatpush.bf16.msra.mxu0 %v805
    %1181 = vmatpush.bf16.msra.mxu0 %v802
    %1182 = vmatpush.bf16.msra.mxu0 %v799
    %1183 = vmatpush.bf16.msra.mxu0 %v796
    %1184 = vmatpush.bf16.msra.mxu0 %v793
    %1185 = vmatpush.bf16.msra.mxu0 %v790
    %1186 = vmatmul.bf16.gmra.mxu0 %v88
    %v1187 = vpop.f32.mrf.mxu0
    %v1188 = vadd.f32 %v294, %v1187
    %v1189 = vpop.f32.mrf.mxu0
    %1190 = vdwg.mxu0
    %1191 = vmatpush.bf16.msra.mxu0 %v835
    %1192 = vmatpush.bf16.msra.mxu0 %v832
    %1193 = vmatpush.bf16.msra.mxu0 %v829
    %1194 = vmatpush.bf16.msra.mxu0 %v826
    %1195 = vmatpush.bf16.msra.mxu0 %v823
    %1196 = vmatpush.bf16.msra.mxu0 %v820
    %1197 = vmatpush.bf16.msra.mxu0 %v817
    %1198 = vmatpush.bf16.msra.mxu0 %v814
    %1199 = vmatmul.bf16.gmra.mxu0 %v89
    %v1200 = vpop.f32.mrf.mxu0
    %v1201 = vadd.f32 %v1188, %v1200
    %v1202 = vpop.f32.mrf.mxu0
    %1203 = vdwg.mxu0
    %1204 = vmatpush.bf16.msra.mxu0 %v859
    %1205 = vmatpush.bf16.msra.mxu0 %v856
    %1206 = vmatpush.bf16.msra.mxu0 %v853
    %1207 = vmatpush.bf16.msra.mxu0 %v850
    %1208 = vmatpush.bf16.msra.mxu0 %v847
    %1209 = vmatpush.bf16.msra.mxu0 %v844
    %1210 = vmatpush.bf16.msra.mxu0 %v841
    %1211 = vmatpush.bf16.msra.mxu0 %v838
    %1212 = vmatmul.bf16.gmra.mxu0 %v90
    %v1213 = vpop.f32.mrf.mxu0
    %v1214 = vadd.f32 %v1201, %v1213
    %v1215 = vpop.f32.mrf.mxu0
    %1216 = vdwg.mxu0
    %1217 = vmatpush.bf16.msra.mxu0 %v883
    %1218 = vmatpush.bf16.msra.mxu0 %v880
    %1219 = vmatpush.bf16.msra.mxu0 %v877
    %1220 = vmatpush.bf16.msra.mxu0 %v874
    %1221 = vmatpush.bf16.msra.mxu0 %v871
    %1222 = vmatpush.bf16.msra.mxu0 %v868
    %1223 = vmatpush.bf16.msra.mxu0 %v865
    %1224 = vmatpush.bf16.msra.mxu0 %v862
    %1225 = vmatmul.bf16.gmra.mxu0 %v91
    %v1226 = vpop.f32.mrf.mxu0
    %v1227 = vadd.f32 %v1214, %v1226
    %v1228 = vpop.f32.mrf.mxu0
    %1229 = vdwg.mxu0
    %1230 = vmatpush.bf16.msra.mxu0 %v907
    %1231 = vmatpush.bf16.msra.mxu0 %v904
    %1232 = vmatpush.bf16.msra.mxu0 %v901
    %1233 = vmatpush.bf16.msra.mxu0 %v898
    %1234 = vmatpush.bf16.msra.mxu0 %v895
    %1235 = vmatpush.bf16.msra.mxu0 %v892
    %1236 = vmatpush.bf16.msra.mxu0 %v889
    %1237 = vmatpush.bf16.msra.mxu0 %v886
    %1238 = vmatmul.bf16.gmra.mxu0 %v92
    %v1239 = vpop.f32.mrf.mxu0
    %v1240 = vadd.f32 %v1227, %v1239
    %v1241 = vpop.f32.mrf.mxu0
    %1242 = vdwg.mxu0
    %1243 = vmatpush.bf16.msra.mxu0 %v931
    %1244 = vmatpush.bf16.msra.mxu0 %v928
    %1245 = vmatpush.bf16.msra.mxu0 %v925
    %1246 = vmatpush.bf16.msra.mxu0 %v922
    %1247 = vmatpush.bf16.msra.mxu0 %v919
    %1248 = vmatpush.bf16.msra.mxu0 %v916
    %1249 = vmatpush.bf16.msra.mxu0 %v913
    %1250 = vmatpush.bf16.msra.mxu0 %v910
    %1251 = vmatmul.bf16.gmra.mxu0 %v93
    %v1252 = vpop.f32.mrf.mxu0
    %v1253 = vadd.f32 %v1240, %v1252
    %v1254 = vpop.f32.mrf.mxu0
    %1255 = vdwg.mxu0
    %1256 = vmatpush.bf16.msra.mxu0 0
    %1257 = vmatpush.bf16.msra.mxu0 0
    %1258 = vmatpush.bf16.msra.mxu0 0
    %1259 = vmatpush.bf16.msra.mxu0 0
    %1260 = vmatpush.bf16.msra.mxu0 0
    %1261 = vmatpush.bf16.msra.mxu0 0
    %1262 = vmatpush.bf16.msra.mxu0 0
    %1263 = vmatpush.bf16.msra.mxu0 %v934
    %1264 = vmatmul.bf16.gmra.mxu0 %v1085
    %v1265 = vpop.f32.mrf.mxu0
    %v1266 = vadd.f32 %v1253, %v1265
    %v1267 = vpop.f32.mrf.mxu0
    %1268 = vdwg.mxu0
    %1269 = vmatpush.bf16.msra.mxu0 %v812
    %1270 = vmatpush.bf16.msra.mxu0 %v809
    %1271 = vmatpush.bf16.msra.mxu0 %v806
    %1272 = vmatpush.bf16.msra.mxu0 %v803
    %1273 = vmatpush.bf16.msra.mxu0 %v800
    %1274 = vmatpush.bf16.msra.mxu0 %v797
    %1275 = vmatpush.bf16.msra.mxu0 %v794
    %1276 = vmatpush.bf16.msra.mxu0 %v791
    %1277 = vmatmul.bf16.gmra.mxu0 %v88
    %v1278 = vpop.f32.mrf.mxu0
    %v1279 = vadd.f32 %v295, %v1278
    %v1280 = vpop.f32.mrf.mxu0
    %1281 = vdwg.mxu0
    %1282 = vmatpush.bf16.msra.mxu0 %v836
    %1283 = vmatpush.bf16.msra.mxu0 %v833
    %1284 = vmatpush.bf16.msra.mxu0 %v830
    %1285 = vmatpush.bf16.msra.mxu0 %v827
    %1286 = vmatpush.bf16.msra.mxu0 %v824
    %1287 = vmatpush.bf16.msra.mxu0 %v821
    %1288 = vmatpush.bf16.msra.mxu0 %v818
    %1289 = vmatpush.bf16.msra.mxu0 %v815
    %1290 = vmatmul.bf16.gmra.mxu0 %v89
    %v1291 = vpop.f32.mrf.mxu0
    %v1292 = vadd.f32 %v1279, %v1291
    %v1293 = vpop.f32.mrf.mxu0
    %1294 = vdwg.mxu0
    %1295 = vmatpush.bf16.msra.mxu0 %v860
    %1296 = vmatpush.bf16.msra.mxu0 %v857
    %1297 = vmatpush.bf16.msra.mxu0 %v854
    %1298 = vmatpush.bf16.msra.mxu0 %v851
    %1299 = vmatpush.bf16.msra.mxu0 %v848
    %1300 = vmatpush.bf16.msra.mxu0 %v845
    %1301 = vmatpush.bf16.msra.mxu0 %v842
    %1302 = vmatpush.bf16.msra.mxu0 %v839
    %1303 = vmatmul.bf16.gmra.mxu0 %v90
    %v1304 = vpop.f32.mrf.mxu0
    %v1305 = vadd.f32 %v1292, %v1304
    %v1306 = vpop.f32.mrf.mxu0
    %1307 = vdwg.mxu0
    %1308 = vmatpush.bf16.msra.mxu0 %v884
    %1309 = vmatpush.bf16.msra.mxu0 %v881
    %1310 = vmatpush.bf16.msra.mxu0 %v878
    %1311 = vmatpush.bf16.msra.mxu0 %v875
    %1312 = vmatpush.bf16.msra.mxu0 %v872
    %1313 = vmatpush.bf16.msra.mxu0 %v869
    %1314 = vmatpush.bf16.msra.mxu0 %v866
    %1315 = vmatpush.bf16.msra.mxu0 %v863
    %1316 = vmatmul.bf16.gmra.mxu0 %v91
    %v1317 = vpop.f32.mrf.mxu0
    %v1318 = vadd.f32 %v1305, %v1317
    %v1319 = vpop.f32.mrf.mxu0
    %1320 = vdwg.mxu0
    %1321 = vmatpush.bf16.msra.mxu0 %v908
    %1322 = vmatpush.bf16.msra.mxu0 %v905
    %1323 = vmatpush.bf16.msra.mxu0 %v902
    %1324 = vmatpush.bf16.msra.mxu0 %v899
    %1325 = vmatpush.bf16.msra.mxu0 %v896
    %1326 = vmatpush.bf16.msra.mxu0 %v893
    %1327 = vmatpush.bf16.msra.mxu0 %v890
    %1328 = vmatpush.bf16.msra.mxu0 %v887
    %1329 = vmatmul.bf16.gmra.mxu0 %v92
    %v1330 = vpop.f32.mrf.mxu0
    %v1331 = vadd.f32 %v1318, %v1330
    %v1332 = vpop.f32.mrf.mxu0
    %1333 = vdwg.mxu0
    %1334 = vmatpush.bf16.msra.mxu0 %v932
    %1335 = vmatpush.bf16.msra.mxu0 %v929
    %1336 = vmatpush.bf16.msra.mxu0 %v926
    %1337 = vmatpush.bf16.msra.mxu0 %v923
    %1338 = vmatpush.bf16.msra.mxu0 %v920
    %1339 = vmatpush.bf16.msra.mxu0 %v917
    %1340 = vmatpush.bf16.msra.mxu0 %v914
    %1341 = vmatpush.bf16.msra.mxu0 %v911
    %1342 = vmatmul.bf16.gmra.mxu0 %v93
    %v1343 = vpop.f32.mrf.mxu0
    %v1344 = vadd.f32 %v1331, %v1343
    %v1345 = vpop.f32.mrf.mxu0
    %1346 = vdwg.mxu0
    %1347 = vmatpush.bf16.msra.mxu0 0
    %1348 = vmatpush.bf16.msra.mxu0 0
    %1349 = vmatpush.bf16.msra.mxu0 0
    %1350 = vmatpush.bf16.msra.mxu0 0
    %1351 = vmatpush.bf16.msra.mxu0 0
    %1352 = vmatpush.bf16.msra.mxu0 0
    %1353 = vmatpush.bf16.msra.mxu0 0
    %1354 = vmatpush.bf16.msra.mxu0 %v935
    %1355 = vmatmul.bf16.gmra.mxu0 %v1085
    %v1356 = vpop.f32.mrf.mxu0
    %v1357 = vadd.f32 %v1344, %v1356
    %v1358 = vpop.f32.mrf.mxu0
    %1359 = vdwg.mxu0
    %v1360 = vmax.f32 %v1175, 0.0
    %v1361 = vmax.f32 %v1266, 0.0
    %v1362 = vmax.f32 %v1357, 0.0
    %v1363 = vpack.c.bf16 %v1360, %v1360
    %v1364 = vpack.c.bf16 %v1361, %v1361
    %v1365 = vpack.c.bf16 %v1362, %v1362
    %v1366 = vld [vmem:[#allocation8] sm:$0xf]
    %v1367 = vld [vmem:[#allocation8 + $0x4] sm:$0xf]
    %v1368 = vld [vmem:[#allocation8 + $0x8] sm:$0xf]
    %v1369 = vld [vmem:[#allocation8 + $0xc] sm:$0xf]
    %v1370 = vld [vmem:[#allocation8 + $0x10] sm:$0xf]
    %v1371 = vld [vmem:[#allocation8 + $0x14] sm:$0xf]
    %v1372 = vld [vmem:[#allocation8 + $0x18] sm:$0xf]
    %v1373 = vld [vmem:[#allocation8 + $0x1c] sm:$0xf]
    %v1374 = vld [vmem:[#allocation8 + $0x20] sm:$0xf]
    %v1375 = vld [vmem:[#allocation8 + $0x24] sm:$0xf]
    %v1376 = vld [vmem:[#allocation8 + $0x28] sm:$0xf]
    %v1377 = vld [vmem:[#allocation8 + $0x2c] sm:$0xf]
    %v1378 = vld [vmem:[#allocation8 + $0x30] sm:$0xf]
    %v1379 = vld [vmem:[#allocation8 + $0x34] sm:$0xf]
    %v1380 = vld [vmem:[#allocation8 + $0x38] sm:$0xf]
    %v1381 = vld [vmem:[#allocation8 + $0x3c] sm:$0xf]
    %v1382 = vld [vmem:[#allocation8 + $0x40] sm:$0xf]
    %v1383 = vld [vmem:[#allocation8 + $0x44] sm:$0xf]
    %v1384 = vld [vmem:[#allocation8 + $0x48] sm:$0xf]
    %v1385 = vld [vmem:[#allocation8 + $0x4c] sm:$0xf]
    %v1386 = vld [vmem:[#allocation8 + $0x50] sm:$0xf]
    %v1387 = vld [vmem:[#allocation8 + $0x54] sm:$0xf]
    %v1388 = vld [vmem:[#allocation8 + $0x58] sm:$0xf]
    %v1389 = vld [vmem:[#allocation8 + $0x5c] sm:$0xf]
    %v1390 = vld [vmem:[#allocation8 + $0x60] sm:$0xf]
    %v1391 = vld [vmem:[#allocation8 + $0x64] sm:$0xf]
    %v1392 = vld [vmem:[#allocation8 + $0x68] sm:$0xf]
    %v1393 = vld [vmem:[#allocation8 + $0x6c] sm:$0xf]
    %v1394 = vld [vmem:[#allocation8 + $0x70] sm:$0xf]
    %v1395 = vld [vmem:[#allocation8 + $0x74] sm:$0xf]
    %v1396 = vld [vmem:[#allocation8 + $0x78] sm:$0xf]
    %v1397 = vld [vmem:[#allocation8 + $0x7c] sm:$0xf]
    %v1398 = vld [vmem:[#allocation8 + $0x80] sm:$0xf]
    %v1399 = vld [vmem:[#allocation8 + $0x84] sm:$0xf]
    %v1400 = vld [vmem:[#allocation8 + $0x88] sm:$0xf]
    %v1401 = vld [vmem:[#allocation8 + $0x8c] sm:$0xf]
    %v1402 = vld [vmem:[#allocation8 + $0x90] sm:$0xf]
    %v1403 = vld [vmem:[#allocation8 + $0x94] sm:$0xf]
    %v1404 = vld [vmem:[#allocation8 + $0x98] sm:$0xf]
    %v1405 = vld [vmem:[#allocation8 + $0x9c] sm:$0xf]
    %v1406 = vld [vmem:[#allocation8 + $0xa0] sm:$0xf]
    %v1407 = vld [vmem:[#allocation8 + $0xa4] sm:$0xf]
    %v1408 = vld [vmem:[#allocation8 + $0xa8] sm:$0xf]
    %v1409 = vld [vmem:[#allocation8 + $0xac] sm:$0xf]
    %v1410 = vld [vmem:[#allocation8 + $0xb0] sm:$0xf]
    %v1411 = vld [vmem:[#allocation8 + $0xb4] sm:$0xf]
    %v1412 = vld [vmem:[#allocation8 + $0xb8] sm:$0xf]
    %v1413 = vld [vmem:[#allocation8 + $0xbc] sm:$0xf]
    %v1414 = vld [vmem:[%s4] sm:$0x1]
    %v1416 = vperm.slane %v1414, 0
    %v1466 = vunpack.c.l.b16 %v1366
    %v1467 = vunpack.c.l.b16 %v1367
    %v1468 = vunpack.c.l.b16 %v1368
    %v1469 = vunpack.c.l.b16 %v1369
    %v1470 = vunpack.c.l.b16 %v1370
    %v1471 = vunpack.c.l.b16 %v1371
    %v1472 = vunpack.c.l.b16 %v1372
    %v1473 = vunpack.c.l.b16 %v1373
    %v1474 = vunpack.c.l.b16 %v1374
    %v1475 = vunpack.c.l.b16 %v1375
    %v1476 = vunpack.c.l.b16 %v1376
    %v1477 = vunpack.c.l.b16 %v1377
    %v1478 = vunpack.c.l.b16 %v1378
    %v1479 = vunpack.c.l.b16 %v1379
    %v1480 = vunpack.c.l.b16 %v1380
    %v1481 = vunpack.c.l.b16 %v1381
    %v1482 = vunpack.c.l.b16 %v1382
    %v1483 = vunpack.c.l.b16 %v1383
    %v1484 = vunpack.c.l.b16 %v1384
    %v1485 = vunpack.c.l.b16 %v1385
    %v1486 = vunpack.c.l.b16 %v1386
    %v1487 = vunpack.c.l.b16 %v1387
    %v1488 = vunpack.c.l.b16 %v1388
    %v1489 = vunpack.c.l.b16 %v1389
    %v1490 = vunpack.c.l.b16 %v1390
    %v1491 = vunpack.c.l.b16 %v1391
    %v1492 = vunpack.c.l.b16 %v1392
    %v1493 = vunpack.c.l.b16 %v1393
    %v1494 = vunpack.c.l.b16 %v1394
    %v1495 = vunpack.c.l.b16 %v1395
    %v1496 = vunpack.c.l.b16 %v1396
    %v1497 = vunpack.c.l.b16 %v1397
    %v1498 = vunpack.c.l.b16 %v1398
    %v1499 = vunpack.c.l.b16 %v1399
    %v1500 = vunpack.c.l.b16 %v1400
    %v1501 = vunpack.c.l.b16 %v1401
    %v1502 = vunpack.c.l.b16 %v1402
    %v1503 = vunpack.c.l.b16 %v1403
    %v1504 = vunpack.c.l.b16 %v1404
    %v1505 = vunpack.c.l.b16 %v1405
    %v1506 = vunpack.c.l.b16 %v1406
    %v1507 = vunpack.c.l.b16 %v1407
    %v1508 = vunpack.c.l.b16 %v1408
    %v1509 = vunpack.c.l.b16 %v1409
    %v1510 = vunpack.c.l.b16 %v1410
    %v1511 = vunpack.c.l.b16 %v1411
    %v1512 = vunpack.c.l.b16 %v1412
    %v1513 = vunpack.c.l.b16 %v1413
    %v1514 = vpack.c.b16 %v1467, %v1466
    %v1515 = vpack.c.b16 %v1469, %v1468
    %v1516 = vpack.c.b16 %v1471, %v1470
    %v1517 = vpack.c.b16 %v1473, %v1472
    %v1518 = vpack.c.b16 %v1475, %v1474
    %v1519 = vpack.c.b16 %v1477, %v1476
    %v1520 = vpack.c.b16 %v1479, %v1478
    %v1521 = vpack.c.b16 %v1481, %v1480
    %v1522 = vpack.c.b16 %v1483, %v1482
    %v1523 = vpack.c.b16 %v1485, %v1484
    %v1524 = vpack.c.b16 %v1487, %v1486
    %v1525 = vpack.c.b16 %v1489, %v1488
    %v1526 = vpack.c.b16 %v1491, %v1490
    %v1527 = vpack.c.b16 %v1493, %v1492
    %v1528 = vpack.c.b16 %v1495, %v1494
    %v1529 = vpack.c.b16 %v1497, %v1496
    %v1530 = vpack.c.b16 %v1499, %v1498
    %v1531 = vpack.c.b16 %v1501, %v1500
    %v1532 = vpack.c.b16 %v1503, %v1502
    %v1533 = vpack.c.b16 %v1505, %v1504
    %v1534 = vpack.c.b16 %v1507, %v1506
    %v1535 = vpack.c.b16 %v1509, %v1508
    %v1536 = vpack.c.b16 %v1511, %v1510
    %v1537 = vpack.c.b16 %v1513, %v1512
    %1562 = vmatpush.bf16.msra.mxu0 %v1521
    %1563 = vmatpush.bf16.msra.mxu0 %v1520
    %1564 = vmatpush.bf16.msra.mxu0 %v1519
    %1565 = vmatpush.bf16.msra.mxu0 %v1518
    %1566 = vmatpush.bf16.msra.mxu0 %v1517
    %1567 = vmatpush.bf16.msra.mxu0 %v1516
    %1568 = vmatpush.bf16.msra.mxu0 %v1515
    %1569 = vmatpush.bf16.msra.mxu0 %v1514
    %1570 = vmatmul.bf16.gmra.mxu0 %v1363
    %v1571 = vpop.f32.mrf.mxu0
    %v1572 = vadd.f32 %v1416, %v1571
    %v1573 = vpop.f32.mrf.mxu0
    %1574 = vdwg.mxu0
    %1575 = vmatpush.bf16.msra.mxu0 %v1529
    %1576 = vmatpush.bf16.msra.mxu0 %v1528
    %1577 = vmatpush.bf16.msra.mxu0 %v1527
    %1578 = vmatpush.bf16.msra.mxu0 %v1526
    %1579 = vmatpush.bf16.msra.mxu0 %v1525
    %1580 = vmatpush.bf16.msra.mxu0 %v1524
    %1581 = vmatpush.bf16.msra.mxu0 %v1523
    %1582 = vmatpush.bf16.msra.mxu0 %v1522
    %1583 = vmatmul.bf16.gmra.mxu0 %v1364
    %v1584 = vpop.f32.mrf.mxu0
    %v1585 = vadd.f32 %v1572, %v1584
    %v1586 = vpop.f32.mrf.mxu0
    %1587 = vdwg.mxu0
    %1588 = vmatpush.bf16.msra.mxu0 %v1537
    %1589 = vmatpush.bf16.msra.mxu0 %v1536
    %1590 = vmatpush.bf16.msra.mxu0 %v1535
    %1591 = vmatpush.bf16.msra.mxu0 %v1534
    %1592 = vmatpush.bf16.msra.mxu0 %v1533
    %1593 = vmatpush.bf16.msra.mxu0 %v1532
    %1594 = vmatpush.bf16.msra.mxu0 %v1531
    %1595 = vmatpush.bf16.msra.mxu0 %v1530
    %1596 = vmatmul.bf16.gmra.mxu0 %v1365
    %v1597 = vpop.f32.mrf.mxu0
    %v1598 = vadd.f32 %v1585, %v1597
    %v1599 = vpop.f32.mrf.mxu0
    %1600 = vdwg.mxu0
    %1601 = vst [vmem:[#allocation10] sm:$0xff] %v1598
    // Predicated region
    $region38: #{tpu_custom_call.1} parent=1 // pred_check
      _
    $region39: #{tpu_custom_call.1} parent=1 // pred_check_branch
      %1603 = sbr.rel (0) target = $region41
    $region40: #{tpu_custom_call.1} parent=1 // pred_region
      %1605 = vsyncadd [#allocation4], 0
      %s1607 = sshll.u32 [#allocation10], 4
      %s1608 = int_to_ptr.vmem [resolvable:$true] %s1607
      %s1609 = sshll.u32 %s5, 4
      %s1610 = int_to_ptr.hbm [resolvable:$true] %s1609
      %1612 = dma.vmem_to_hbm [thread:$0]  %s1608, 128, %s1610, [#allocation4]
    $region41: #{tpu_custom_call.1} parent=1 // pred_fallthru
      _
    // Predicated region
    $region42: #{tpu_custom_call.1} parent=1 // pred_check
      _
    $region43: #{tpu_custom_call.1} parent=1 // pred_check_branch
      %1614 = sbr.rel (0) target = $region45
    $region44: #{tpu_custom_call.1} parent=1 // pred_region
      %1616 = dma.done [#allocation4], 128
    $region45: #{tpu_custom_call.1} parent=1 // pred_fallthru
      _
    %1617 = vsyncpa [#allocation3], 1
    %1618 = vsyncpa [#allocation6], 1
    %1619 = vsyncpa [#allocation9], 1
    %1620 = vsyncpa [#allocation4], 1

</llo_original>
